<compile_context>
chip_gen: v6e
topology: v6e:2x2x1
jax: 0.10.0
libtpu: 0.0.40
codegen_flags: <defaults>
</compile_context>

<pallas_src>
import functools
import math

import jax
import jax.numpy as jnp
from jax.experimental import pallas as pl
from jax.experimental.pallas import tpu as pltpu


# --------------------------------- kernel -----------------------------------
def modulator_kernel(x_ref, w_ref, o_ref):
    # (B, K) @ (K, N) -> (B, N), fp32 accumulation on the MXU.
    # Weight columns are pre-permuted so the output rows are already laid out
    # as (num_freqs, dim) -> lane-dense store, no in-kernel transpose.
    o_ref[...] = jnp.dot(
        x_ref[...], w_ref[...], preferred_element_type=jnp.float32
    ).astype(o_ref.dtype)
    # TODO(synk): if a sin/cos frequency embedding or scale/shift modulation
    # consumes this output, fuse it here (EUP/VALU slots are free next to the
    # matmul) instead of a separate XLA op.


# ----------------------------- one-time weight prep --------------------------
def prepare_modulator_weight(weight, num_freqs, dim, dtype=jnp.bfloat16):
    """Fold reshape(B, dim, F).permute(0, 2, 1) into the weight column order
    and cast to the matmul operand dtype.

    weight: (dim*num_freqs, K) in PyTorch nn.Linear layout.
    Returns (K, dim*num_freqs) with columns ordered as (freq, dim) so the
    kernel output is directly reshapeable to (B, num_freqs, dim).

    Call this ONCE at module-init / parameter-prep time, not per forward.
    """
    N, K = weight.shape
    assert N == dim * num_freqs, (weight.shape, dim, num_freqs)
    w_perm = (
        weight.T.reshape(K, dim, num_freqs)
        .transpose(0, 2, 1)
        .reshape(K, N)
        .astype(dtype)
    )
    return w_perm


# --------------------------------- wrapper ----------------------------------
@functools.partial(jax.jit, static_argnums=(2, 3))
def lazy_linear_modulator(x, w_prepped, num_freqs, dim):
    """Forward pass.

    x:         (B, C, H, W)
    w_prepped: (C*H*W, dim*num_freqs) from prepare_modulator_weight().
    Returns:   (B, num_freqs, dim) float32.
    """
    B = x.shape[0]
    K = math.prod(x.shape[1:])
    N = dim * num_freqs
    assert w_prepped.shape == (K, N), (w_prepped.shape, (K, N))

    x_flat = x.reshape(B, K).astype(w_prepped.dtype)

    # Single-step, fully VMEM-resident pallas_call (no grid). For the target
    # shapes (K ~ 1e3, N ~ few hundred) the footprint is < 1 MiB; re-tile over
    # N / K only if K grows into the tens of thousands (v7x 64 MiB VMEM).
    out = pl.pallas_call(
        modulator_kernel,
        out_shape=jax.ShapeDtypeStruct((B, N), jnp.float32),
        in_specs=[
            pl.BlockSpec(memory_space=pltpu.MemorySpace.VMEM),
            pl.BlockSpec(memory_space=pltpu.MemorySpace.VMEM),
        ],
        out_specs=pl.BlockSpec(memory_space=pltpu.MemorySpace.VMEM),
    )(x_flat, w_prepped)

    # Trailing-dim reshape only: pure metadata, no data movement.
    return out.reshape(B, num_freqs, dim)


# ---------------------------- pure-JAX reference ----------------------------
def reference(x, weight, num_freqs, dim):
    B = x.shape[0]
    # Apply the same bf16 operand rounding the kernel uses; accumulate in fp32.
    xb = x.reshape(B, -1).astype(jnp.bfloat16).astype(jnp.float32)
    wb = weight.astype(jnp.bfloat16).astype(jnp.float32)
    y = xb @ wb.T                                   # (B, dim*num_freqs)
    return y.reshape(B, dim, num_freqs).transpose(0, 2, 1)


# ----------------------------------- main ------------------------------------
if __name__ == "__main__":
    B = 2
    vae_channel = 4
    latent_shape = 16     # H = W = 16
    num_freqs = 8
    dim = 32
    K = vae_channel * latent_shape * latent_shape   # 1024
    N = dim * num_freqs                             # 256

    key = jax.random.PRNGKey(0)
    kx, kw = jax.random.split(key)
    x = jax.random.normal(kx, (B, vae_channel, latent_shape, latent_shape),
                          jnp.float32)
    weight = 0.05 * jax.random.normal(kw, (N, K), jnp.float32)

    # One-time parameter prep (hoisted out of the per-call path).
    w_prepped = jax.block_until_ready(
        prepare_modulator_weight(weight, num_freqs, dim))

    out = lazy_linear_modulator(x, w_prepped, num_freqs, dim)
    out = jax.block_until_ready(out)

    ref = reference(x, weight, num_freqs, dim)
    assert out.shape == (B, num_freqs, dim), out.shape
    assert jnp.allclose(out, ref, rtol=2e-3, atol=2e-3), (
        float(jnp.max(jnp.abs(out - ref))))

    print("KERNEL_OK")
</pallas_src>

<mosaic_0001>
module attributes {stable_mosaic.version = 11 : i64} {
  func.func @modulator_kernel(%arg0: memref<2x1024xbf16, #tpu.memory_space<vmem>>, %arg1: memref<1024x256xbf16, #tpu.memory_space<vmem>>, %arg2: memref<2x256xf32, #tpu.memory_space<vmem>>) attributes {dimension_semantics = [], scalar_prefetch = 0 : i64, scratch_operands = 0 : i64, tpu.core_type = #tpu.core_type<tc>} {
    %c0 = arith.constant 0 : index
    %c0_0 = arith.constant 0 : index
    %0 = vector.load %arg0[%c0, %c0_0] : memref<2x1024xbf16, #tpu.memory_space<vmem>>, vector<2x1024xbf16>
    %c0_1 = arith.constant 0 : index
    %c0_2 = arith.constant 0 : index
    %1 = vector.load %arg1[%c0_1, %c0_2] : memref<1024x256xbf16, #tpu.memory_space<vmem>>, vector<1024x256xbf16>
    %cst = arith.constant dense<0.000000e+00> : vector<2x256xf32>
    %2 = tpu.matmul %0, %1, %cst {dimension_numbers = #tpu.dot_dimension_numbers<[1], [0], [0], [1], [0, 0, 1, 1], [], []>} : vector<2x1024xbf16>, vector<1024x256xbf16>, vector<2x256xf32> -> vector<2x256xf32>
    %c0_3 = arith.constant 0 : index
    %c0_4 = arith.constant 0 : index
    %3 = vector.load %arg2[%c0_3, %c0_4] : memref<2x256xf32, #tpu.memory_space<vmem>>, vector<2x256xf32>
    tpu.vector_store %arg2[%c0_3, %c0_4], %2 {strides = array<i32>} : memref<2x256xf32, #tpu.memory_space<vmem>>, vector<2x256xf32>,
    return
  }
}

</mosaic_0001>

<llo_original>
// kernel: lazy_linear_modulator.1
$region0: #{lazy_linear_modulator.1}
  #allocation0 [shape = 'u32[]', space=smem, size = 0x4, offset = 0x4, fixed_abs, tag = 'smem constant byte address 0x4 - core index']
  #allocation1 [shape = 'u32[144,128]{1,0:T(1,128)}', space=vmem, size = 0x12000, scoped, tag = 'internal scratch']
  %s0 = inlined_call_operand.vmem [shape: bf16[2,1024], index: 0, kind: input, shape index: {}]
  %s1 = inlined_call_operand.hbm [shape: bf16[1024,256], index: 1, kind: input, shape index: {}]
  %s2 = inlined_call_operand.vmem [shape: f32[2,256], index: 2, kind: output, shape index: {}]
  %s3 = sld [smem:[#allocation0]]
  $region22: #{lazy_linear_modulator.1} parent=0
    _
  %s5 = ssub.s32 1, %s3
  %s6 = scalar_select 0, %s5, %s3
  $region1: #{lazy_linear_modulator.1} parent=0
    #allocation2 [shape = 'u8[524288]{0}', space=vmem, size = 0x80000, scoped, tag = 'input window, operand 1, single buffered']
    #allocation3 [shape = 's32[1]{0}', space=sflag, size = 0x4, scoped, tag = 'scoped memory for lazy_linear_modulator.1']
    %7 = vsyncpa [#allocation3], 0
    // Predicated region
    $region2: #{lazy_linear_modulator.1} parent=1 // pred_check
      _
    $region3: #{lazy_linear_modulator.1} parent=1 // pred_check_branch
      %9 = sbr.rel (0) target = $region5
    $region4: #{lazy_linear_modulator.1} parent=1 // pred_region
      _
    $region5: #{lazy_linear_modulator.1} parent=1 // pred_fallthru
      _
    // Predicated region
    $region6: #{lazy_linear_modulator.1} parent=1 // pred_check
      _
    $region7: #{lazy_linear_modulator.1} parent=1 // pred_check_branch
      %11 = sbr.rel (0) target = $region9
    $region8: #{lazy_linear_modulator.1} parent=1 // pred_region
      %s13 = ssub.s32 16384, 16384
      %14 = vsyncadd [#allocation3], %s13
      %s15 = sshll.u32 [#allocation2], 4
      %s16 = int_to_ptr.vmem [resolvable:$true] %s15
      %21 = dma.hbm_to_vmem [thread:$0]  %s1, 16384, %s16, [#allocation3], 128, 128, 8
    $region9: #{lazy_linear_modulator.1} parent=1 // pred_fallthru
      _
    // Predicated region
    $region10: #{lazy_linear_modulator.1} parent=1 // pred_check
      _
    $region11: #{lazy_linear_modulator.1} parent=1 // pred_check_branch
      %23 = sbr.rel (0) target = $region13
    $region12: #{lazy_linear_modulator.1} parent=1 // pred_region
      %24 = dma.done [#allocation3], 16384
    $region13: #{lazy_linear_modulator.1} parent=1 // pred_fallthru
      _
    %v25 = vld [vmem:[%s0] sm:$0xff]
    %v26 = vld [vmem:[#allocation2] sm:$0xff]
    %v27 = vld [vmem:[#allocation2 + $0x8] sm:$0xff]
    %v28 = vld [vmem:[#allocation2 + $0x10] sm:$0xff]
    %v29 = vld [vmem:[#allocation2 + $0x18] sm:$0xff]
    %v30 = vld [vmem:[#allocation2 + $0x20] sm:$0xff]
    %v31 = vld [vmem:[#allocation2 + $0x28] sm:$0xff]
    %v32 = vld [vmem:[#allocation2 + $0x30] sm:$0xff]
    %v33 = vld [vmem:[#allocation2 + $0x38] sm:$0xff]
    %v34 = vld [vmem:[#allocation2 + $0x40] sm:$0xff]
    %v35 = vld [vmem:[#allocation2 + $0x48] sm:$0xff]
    %v36 = vld [vmem:[#allocation2 + $0x50] sm:$0xff]
    %v37 = vld [vmem:[#allocation2 + $0x58] sm:$0xff]
    %v38 = vld [vmem:[#allocation2 + $0x60] sm:$0xff]
    %v39 = vld [vmem:[#allocation2 + $0x68] sm:$0xff]
    %v40 = vld [vmem:[#allocation2 + $0x70] sm:$0xff]
    %v41 = vld [vmem:[#allocation2 + $0x78] sm:$0xff]
    %v42 = vld [vmem:[#allocation2 + $0x80] sm:$0xff]
    %v43 = vld [vmem:[#allocation2 + $0x88] sm:$0xff]
    %v44 = vld [vmem:[#allocation2 + $0x90] sm:$0xff]
    %v45 = vld [vmem:[#allocation2 + $0x98] sm:$0xff]
    %v46 = vld [vmem:[#allocation2 + $0xa0] sm:$0xff]
    %v47 = vld [vmem:[#allocation2 + $0xa8] sm:$0xff]
    %v48 = vld [vmem:[#allocation2 + $0xb0] sm:$0xff]
    %v49 = vld [vmem:[#allocation2 + $0xb8] sm:$0xff]
    %v50 = vld [vmem:[#allocation2 + $0xc0] sm:$0xff]
    %v51 = vld [vmem:[#allocation2 + $0xc8] sm:$0xff]
    %v52 = vld [vmem:[#allocation2 + $0xd0] sm:$0xff]
    %v53 = vld [vmem:[#allocation2 + $0xd8] sm:$0xff]
    %v54 = vld [vmem:[#allocation2 + $0xe0] sm:$0xff]
    %v55 = vld [vmem:[#allocation2 + $0xe8] sm:$0xff]
    %v56 = vld [vmem:[#allocation2 + $0xf0] sm:$0xff]
    %v57 = vld [vmem:[#allocation2 + $0xf8] sm:$0xff]
    %v58 = vld [vmem:[#allocation2 + $0x100] sm:$0xff]
    %v59 = vld [vmem:[#allocation2 + $0x108] sm:$0xff]
    %v60 = vld [vmem:[#allocation2 + $0x110] sm:$0xff]
    %v61 = vld [vmem:[#allocation2 + $0x118] sm:$0xff]
    %v62 = vld [vmem:[#allocation2 + $0x120] sm:$0xff]
    %v63 = vld [vmem:[#allocation2 + $0x128] sm:$0xff]
    %v64 = vld [vmem:[#allocation2 + $0x130] sm:$0xff]
    %v65 = vld [vmem:[#allocation2 + $0x138] sm:$0xff]
    %v66 = vld [vmem:[#allocation2 + $0x140] sm:$0xff]
    %v67 = vld [vmem:[#allocation2 + $0x148] sm:$0xff]
    %v68 = vld [vmem:[#allocation2 + $0x150] sm:$0xff]
    %v69 = vld [vmem:[#allocation2 + $0x158] sm:$0xff]
    %v70 = vld [vmem:[#allocation2 + $0x160] sm:$0xff]
    %v71 = vld [vmem:[#allocation2 + $0x168] sm:$0xff]
    %v72 = vld [vmem:[#allocation2 + $0x170] sm:$0xff]
    %v73 = vld [vmem:[#allocation2 + $0x178] sm:$0xff]
    %v74 = vld [vmem:[#allocation2 + $0x180] sm:$0xff]
    %v75 = vld [vmem:[#allocation2 + $0x188] sm:$0xff]
    %v76 = vld [vmem:[#allocation2 + $0x190] sm:$0xff]
    %v77 = vld [vmem:[#allocation2 + $0x198] sm:$0xff]
    %v78 = vld [vmem:[#allocation2 + $0x1a0] sm:$0xff]
    %v79 = vld [vmem:[#allocation2 + $0x1a8] sm:$0xff]
    %v80 = vld [vmem:[#allocation2 + $0x1b0] sm:$0xff]
    %v81 = vld [vmem:[#allocation2 + $0x1b8] sm:$0xff]
    %v82 = vld [vmem:[#allocation2 + $0x1c0] sm:$0xff]
    %v83 = vld [vmem:[#allocation2 + $0x1c8] sm:$0xff]
    %v84 = vld [vmem:[#allocation2 + $0x1d0] sm:$0xff]
    %v85 = vld [vmem:[#allocation2 + $0x1d8] sm:$0xff]
    %v86 = vld [vmem:[#allocation2 + $0x1e0] sm:$0xff]
    %v87 = vld [vmem:[#allocation2 + $0x1e8] sm:$0xff]
    %v88 = vld [vmem:[#allocation2 + $0x1f0] sm:$0xff]
    %v89 = vld [vmem:[#allocation2 + $0x1f8] sm:$0xff]
    %v90 = vld [vmem:[#allocation2 + $0x200] sm:$0xff]
    %v91 = vld [vmem:[#allocation2 + $0x208] sm:$0xff]
    %v92 = vld [vmem:[#allocation2 + $0x210] sm:$0xff]
    %v93 = vld [vmem:[#allocation2 + $0x218] sm:$0xff]
    %v94 = vld [vmem:[#allocation2 + $0x220] sm:$0xff]
    %v95 = vld [vmem:[#allocation2 + $0x228] sm:$0xff]
    %v96 = vld [vmem:[#allocation2 + $0x230] sm:$0xff]
    %v97 = vld [vmem:[#allocation2 + $0x238] sm:$0xff]
    %v98 = vld [vmem:[#allocation2 + $0x240] sm:$0xff]
    %v99 = vld [vmem:[#allocation2 + $0x248] sm:$0xff]
    %v100 = vld [vmem:[#allocation2 + $0x250] sm:$0xff]
    %v101 = vld [vmem:[#allocation2 + $0x258] sm:$0xff]
    %v102 = vld [vmem:[#allocation2 + $0x260] sm:$0xff]
    %v103 = vld [vmem:[#allocation2 + $0x268] sm:$0xff]
    %v104 = vld [vmem:[#allocation2 + $0x270] sm:$0xff]
    %v105 = vld [vmem:[#allocation2 + $0x278] sm:$0xff]
    %v106 = vld [vmem:[#allocation2 + $0x280] sm:$0xff]
    %v107 = vld [vmem:[#allocation2 + $0x288] sm:$0xff]
    %v108 = vld [vmem:[#allocation2 + $0x290] sm:$0xff]
    %v109 = vld [vmem:[#allocation2 + $0x298] sm:$0xff]
    %v110 = vld [vmem:[#allocation2 + $0x2a0] sm:$0xff]
    %v111 = vld [vmem:[#allocation2 + $0x2a8] sm:$0xff]
    %v112 = vld [vmem:[#allocation2 + $0x2b0] sm:$0xff]
    %v113 = vld [vmem:[#allocation2 + $0x2b8] sm:$0xff]
    %v114 = vld [vmem:[#allocation2 + $0x2c0] sm:$0xff]
    %v115 = vld [vmem:[#allocation2 + $0x2c8] sm:$0xff]
    %v116 = vld [vmem:[#allocation2 + $0x2d0] sm:$0xff]
    %v117 = vld [vmem:[#allocation2 + $0x2d8] sm:$0xff]
    %v118 = vld [vmem:[#allocation2 + $0x2e0] sm:$0xff]
    %v119 = vld [vmem:[#allocation2 + $0x2e8] sm:$0xff]
    %v120 = vld [vmem:[#allocation2 + $0x2f0] sm:$0xff]
    %v121 = vld [vmem:[#allocation2 + $0x2f8] sm:$0xff]
    %v122 = vld [vmem:[#allocation2 + $0x300] sm:$0xff]
    %v123 = vld [vmem:[#allocation2 + $0x308] sm:$0xff]
    %v124 = vld [vmem:[#allocation2 + $0x310] sm:$0xff]
    %v125 = vld [vmem:[#allocation2 + $0x318] sm:$0xff]
    %v126 = vld [vmem:[#allocation2 + $0x320] sm:$0xff]
    %v127 = vld [vmem:[#allocation2 + $0x328] sm:$0xff]
    %v128 = vld [vmem:[#allocation2 + $0x330] sm:$0xff]
    %v129 = vld [vmem:[#allocation2 + $0x338] sm:$0xff]
    %v130 = vld [vmem:[#allocation2 + $0x340] sm:$0xff]
    %v131 = vld [vmem:[#allocation2 + $0x348] sm:$0xff]
    %v132 = vld [vmem:[#allocation2 + $0x350] sm:$0xff]
    %v133 = vld [vmem:[#allocation2 + $0x358] sm:$0xff]
    %v134 = vld [vmem:[#allocation2 + $0x360] sm:$0xff]
    %v135 = vld [vmem:[#allocation2 + $0x368] sm:$0xff]
    %v136 = vld [vmem:[#allocation2 + $0x370] sm:$0xff]
    %v137 = vld [vmem:[#allocation2 + $0x378] sm:$0xff]
    %v138 = vld [vmem:[#allocation2 + $0x380] sm:$0xff]
    %v139 = vld [vmem:[#allocation2 + $0x388] sm:$0xff]
    %v140 = vld [vmem:[#allocation2 + $0x390] sm:$0xff]
    %v141 = vld [vmem:[#allocation2 + $0x398] sm:$0xff]
    %v142 = vld [vmem:[#allocation2 + $0x3a0] sm:$0xff]
    %v143 = vld [vmem:[#allocation2 + $0x3a8] sm:$0xff]
    %v144 = vld [vmem:[#allocation2 + $0x3b0] sm:$0xff]
    %v145 = vld [vmem:[#allocation2 + $0x3b8] sm:$0xff]
    %v146 = vld [vmem:[#allocation2 + $0x3c0] sm:$0xff]
    %v147 = vld [vmem:[#allocation2 + $0x3c8] sm:$0xff]
    %v148 = vld [vmem:[#allocation2 + $0x3d0] sm:$0xff]
    %v149 = vld [vmem:[#allocation2 + $0x3d8] sm:$0xff]
    %v150 = vld [vmem:[#allocation2 + $0x3e0] sm:$0xff]
    %v151 = vld [vmem:[#allocation2 + $0x3e8] sm:$0xff]
    %v152 = vld [vmem:[#allocation2 + $0x3f0] sm:$0xff]
    %v153 = vld [vmem:[#allocation2 + $0x3f8] sm:$0xff]
    %v155 = vcombine.high %v25, %v25
    %v157 = vunpack.c.l.s4 1966171168
    %v158 = vunpack.c.0.s8 %v157
    %v159 = vlaneseq
    %v160 = vshrl.u32 %v159, 7
    %v161 = vsub.s32 %v158, %v160
    %v162 = vrot.slane %v25, %v161
    %v164 = vunpack.c.l.s4 1966171168
    %v165 = vunpack.c.0.s8 %v164
    %v166 = vlaneseq
    %v167 = vshrl.u32 %v166, 7
    %v168 = vsub.s32 %v165, %v167
    %v169 = vrot.slane %v155, %v168
    %v170 = vcombine.high %v162, %v162
    %v171 = vcombine.high %v169, %v169
    %v173 = vunpack.c.l.s4 1966171168
    %v174 = vunpack.c.0.s8 %v173
    %v175 = vlaneseq
    %v176 = vshrl.u32 %v175, 7
    %v177 = vsub.s32 %v174, %v176
    %v178 = vrot.slane %v162, %v177
    %v180 = vunpack.c.l.s4 1966171168
    %v181 = vunpack.c.0.s8 %v180
    %v182 = vlaneseq
    %v183 = vshrl.u32 %v182, 7
    %v184 = vsub.s32 %v181, %v183
    %v185 = vrot.slane %v169, %v184
    %v187 = vunpack.c.l.s4 1966171168
    %v188 = vunpack.c.0.s8 %v187
    %v189 = vlaneseq
    %v190 = vshrl.u32 %v189, 7
    %v191 = vsub.s32 %v188, %v190
    %v192 = vrot.slane %v170, %v191
    %v194 = vunpack.c.l.s4 1966171168
    %v195 = vunpack.c.0.s8 %v194
    %v196 = vlaneseq
    %v197 = vshrl.u32 %v196, 7
    %v198 = vsub.s32 %v195, %v197
    %v199 = vrot.slane %v171, %v198
    %v200 = vcombine.high %v178, %v178
    %v201 = vcombine.high %v185, %v185
    %v202 = vcombine.high %v192, %v192
    %v203 = vcombine.high %v199, %v199
    %v340 = vunpack.c.l.b16 %v26
    %v341 = vunpack.c.h.b16 %v26
    %v342 = vunpack.c.l.b16 %v27
    %v343 = vunpack.c.h.b16 %v27
    %v344 = vunpack.c.l.b16 %v28
    %v345 = vunpack.c.h.b16 %v28
    %v346 = vunpack.c.l.b16 %v29
    %v347 = vunpack.c.h.b16 %v29
    %v348 = vunpack.c.l.b16 %v30
    %v349 = vunpack.c.h.b16 %v30
    %v350 = vunpack.c.l.b16 %v31
    %v351 = vunpack.c.h.b16 %v31
    %v352 = vunpack.c.l.b16 %v32
    %v353 = vunpack.c.h.b16 %v32
    %v354 = vunpack.c.l.b16 %v33
    %v355 = vunpack.c.h.b16 %v33
    %v356 = vunpack.c.l.b16 %v34
    %v357 = vunpack.c.h.b16 %v34
    %v358 = vunpack.c.l.b16 %v35
    %v359 = vunpack.c.h.b16 %v35
    %v360 = vunpack.c.l.b16 %v36
    %v361 = vunpack.c.h.b16 %v36
    %v362 = vunpack.c.l.b16 %v37
    %v363 = vunpack.c.h.b16 %v37
    %v364 = vunpack.c.l.b16 %v38
    %v365 = vunpack.c.h.b16 %v38
    %v366 = vunpack.c.l.b16 %v39
    %v367 = vunpack.c.h.b16 %v39
    %v368 = vunpack.c.l.b16 %v40
    %v369 = vunpack.c.h.b16 %v40
    %v370 = vunpack.c.l.b16 %v41
    %v371 = vunpack.c.h.b16 %v41
    %v372 = vunpack.c.l.b16 %v42
    %v373 = vunpack.c.h.b16 %v42
    %v374 = vunpack.c.l.b16 %v43
    %v375 = vunpack.c.h.b16 %v43
    %v376 = vunpack.c.l.b16 %v44
    %v377 = vunpack.c.h.b16 %v44
    %v378 = vunpack.c.l.b16 %v45
    %v379 = vunpack.c.h.b16 %v45
    %v380 = vunpack.c.l.b16 %v46
    %v381 = vunpack.c.h.b16 %v46
    %v382 = vunpack.c.l.b16 %v47
    %v383 = vunpack.c.h.b16 %v47
    %v384 = vunpack.c.l.b16 %v48
    %v385 = vunpack.c.h.b16 %v48
    %v386 = vunpack.c.l.b16 %v49
    %v387 = vunpack.c.h.b16 %v49
    %v388 = vunpack.c.l.b16 %v50
    %v389 = vunpack.c.h.b16 %v50
    %v390 = vunpack.c.l.b16 %v51
    %v391 = vunpack.c.h.b16 %v51
    %v392 = vunpack.c.l.b16 %v52
    %v393 = vunpack.c.h.b16 %v52
    %v394 = vunpack.c.l.b16 %v53
    %v395 = vunpack.c.h.b16 %v53
    %v396 = vunpack.c.l.b16 %v54
    %v397 = vunpack.c.h.b16 %v54
    %v398 = vunpack.c.l.b16 %v55
    %v399 = vunpack.c.h.b16 %v55
    %v400 = vunpack.c.l.b16 %v56
    %v401 = vunpack.c.h.b16 %v56
    %v402 = vunpack.c.l.b16 %v57
    %v403 = vunpack.c.h.b16 %v57
    %v404 = vunpack.c.l.b16 %v58
    %v405 = vunpack.c.h.b16 %v58
    %v406 = vunpack.c.l.b16 %v59
    %v407 = vunpack.c.h.b16 %v59
    %v408 = vunpack.c.l.b16 %v60
    %v409 = vunpack.c.h.b16 %v60
    %v410 = vunpack.c.l.b16 %v61
    %v411 = vunpack.c.h.b16 %v61
    %v412 = vunpack.c.l.b16 %v62
    %v413 = vunpack.c.h.b16 %v62
    %v414 = vunpack.c.l.b16 %v63
    %v415 = vunpack.c.h.b16 %v63
    %v416 = vunpack.c.l.b16 %v64
    %v417 = vunpack.c.h.b16 %v64
    %v418 = vunpack.c.l.b16 %v65
    %v419 = vunpack.c.h.b16 %v65
    %v420 = vunpack.c.l.b16 %v66
    %v421 = vunpack.c.h.b16 %v66
    %v422 = vunpack.c.l.b16 %v67
    %v423 = vunpack.c.h.b16 %v67
    %v424 = vunpack.c.l.b16 %v68
    %v425 = vunpack.c.h.b16 %v68
    %v426 = vunpack.c.l.b16 %v69
    %v427 = vunpack.c.h.b16 %v69
    %v428 = vunpack.c.l.b16 %v70
    %v429 = vunpack.c.h.b16 %v70
    %v430 = vunpack.c.l.b16 %v71
    %v431 = vunpack.c.h.b16 %v71
    %v432 = vunpack.c.l.b16 %v72
    %v433 = vunpack.c.h.b16 %v72
    %v434 = vunpack.c.l.b16 %v73
    %v435 = vunpack.c.h.b16 %v73
    %v436 = vunpack.c.l.b16 %v74
    %v437 = vunpack.c.h.b16 %v74
    %v438 = vunpack.c.l.b16 %v75
    %v439 = vunpack.c.h.b16 %v75
    %v440 = vunpack.c.l.b16 %v76
    %v441 = vunpack.c.h.b16 %v76
    %v442 = vunpack.c.l.b16 %v77
    %v443 = vunpack.c.h.b16 %v77
    %v444 = vunpack.c.l.b16 %v78
    %v445 = vunpack.c.h.b16 %v78
    %v446 = vunpack.c.l.b16 %v79
    %v447 = vunpack.c.h.b16 %v79
    %v448 = vunpack.c.l.b16 %v80
    %v449 = vunpack.c.h.b16 %v80
    %v450 = vunpack.c.l.b16 %v81
    %v451 = vunpack.c.h.b16 %v81
    %v452 = vunpack.c.l.b16 %v82
    %v453 = vunpack.c.h.b16 %v82
    %v454 = vunpack.c.l.b16 %v83
    %v455 = vunpack.c.h.b16 %v83
    %v456 = vunpack.c.l.b16 %v84
    %v457 = vunpack.c.h.b16 %v84
    %v458 = vunpack.c.l.b16 %v85
    %v459 = vunpack.c.h.b16 %v85
    %v460 = vunpack.c.l.b16 %v86
    %v461 = vunpack.c.h.b16 %v86
    %v462 = vunpack.c.l.b16 %v87
    %v463 = vunpack.c.h.b16 %v87
    %v464 = vunpack.c.l.b16 %v88
    %v465 = vunpack.c.h.b16 %v88
    %v466 = vunpack.c.l.b16 %v89
    %v467 = vunpack.c.h.b16 %v89
    %v468 = vunpack.c.l.b16 %v90
    %v469 = vunpack.c.h.b16 %v90
    %v470 = vunpack.c.l.b16 %v91
    %v471 = vunpack.c.h.b16 %v91
    %v472 = vunpack.c.l.b16 %v92
    %v473 = vunpack.c.h.b16 %v92
    %v474 = vunpack.c.l.b16 %v93
    %v475 = vunpack.c.h.b16 %v93
    %v476 = vunpack.c.l.b16 %v94
    %v477 = vunpack.c.h.b16 %v94
    %v478 = vunpack.c.l.b16 %v95
    %v479 = vunpack.c.h.b16 %v95
    %v480 = vunpack.c.l.b16 %v96
    %v481 = vunpack.c.h.b16 %v96
    %v482 = vunpack.c.l.b16 %v97
    %v483 = vunpack.c.h.b16 %v97
    %v484 = vunpack.c.l.b16 %v98
    %v485 = vunpack.c.h.b16 %v98
    %v486 = vunpack.c.l.b16 %v99
    %v487 = vunpack.c.h.b16 %v99
    %v488 = vunpack.c.l.b16 %v100
    %v489 = vunpack.c.h.b16 %v100
    %v490 = vunpack.c.l.b16 %v101
    %v491 = vunpack.c.h.b16 %v101
    %v492 = vunpack.c.l.b16 %v102
    %v493 = vunpack.c.h.b16 %v102
    %v494 = vunpack.c.l.b16 %v103
    %v495 = vunpack.c.h.b16 %v103
    %v496 = vunpack.c.l.b16 %v104
    %v497 = vunpack.c.h.b16 %v104
    %v498 = vunpack.c.l.b16 %v105
    %v499 = vunpack.c.h.b16 %v105
    %v500 = vunpack.c.l.b16 %v106
    %v501 = vunpack.c.h.b16 %v106
    %v502 = vunpack.c.l.b16 %v107
    %v503 = vunpack.c.h.b16 %v107
    %v504 = vunpack.c.l.b16 %v108
    %v505 = vunpack.c.h.b16 %v108
    %v506 = vunpack.c.l.b16 %v109
    %v507 = vunpack.c.h.b16 %v109
    %v508 = vunpack.c.l.b16 %v110
    %v509 = vunpack.c.h.b16 %v110
    %v510 = vunpack.c.l.b16 %v111
    %v511 = vunpack.c.h.b16 %v111
    %v512 = vunpack.c.l.b16 %v112
    %v513 = vunpack.c.h.b16 %v112
    %v514 = vunpack.c.l.b16 %v113
    %v515 = vunpack.c.h.b16 %v113
    %v516 = vunpack.c.l.b16 %v114
    %v517 = vunpack.c.h.b16 %v114
    %v518 = vunpack.c.l.b16 %v115
    %v519 = vunpack.c.h.b16 %v115
    %v520 = vunpack.c.l.b16 %v116
    %v521 = vunpack.c.h.b16 %v116
    %v522 = vunpack.c.l.b16 %v117
    %v523 = vunpack.c.h.b16 %v117
    %v524 = vunpack.c.l.b16 %v118
    %v525 = vunpack.c.h.b16 %v118
    %v526 = vunpack.c.l.b16 %v119
    %v527 = vunpack.c.h.b16 %v119
    %v528 = vunpack.c.l.b16 %v120
    %v529 = vunpack.c.h.b16 %v120
    %v530 = vunpack.c.l.b16 %v121
    %v531 = vunpack.c.h.b16 %v121
    %v532 = vunpack.c.l.b16 %v122
    %v533 = vunpack.c.h.b16 %v122
    %v534 = vunpack.c.l.b16 %v123
    %v535 = vunpack.c.h.b16 %v123
    %v536 = vunpack.c.l.b16 %v124
    %v537 = vunpack.c.h.b16 %v124
    %v538 = vunpack.c.l.b16 %v125
    %v539 = vunpack.c.h.b16 %v125
    %v540 = vunpack.c.l.b16 %v126
    %v541 = vunpack.c.h.b16 %v126
    %v542 = vunpack.c.l.b16 %v127
    %v543 = vunpack.c.h.b16 %v127
    %v544 = vunpack.c.l.b16 %v128
    %v545 = vunpack.c.h.b16 %v128
    %v546 = vunpack.c.l.b16 %v129
    %v547 = vunpack.c.h.b16 %v129
    %v548 = vunpack.c.l.b16 %v130
    %v549 = vunpack.c.h.b16 %v130
    %v550 = vunpack.c.l.b16 %v131
    %v551 = vunpack.c.h.b16 %v131
    %v552 = vunpack.c.l.b16 %v132
    %v553 = vunpack.c.h.b16 %v132
    %v554 = vunpack.c.l.b16 %v133
    %v555 = vunpack.c.h.b16 %v133
    %v556 = vunpack.c.l.b16 %v134
    %v557 = vunpack.c.h.b16 %v134
    %v558 = vunpack.c.l.b16 %v135
    %v559 = vunpack.c.h.b16 %v135
    %v560 = vunpack.c.l.b16 %v136
    %v561 = vunpack.c.h.b16 %v136
    %v562 = vunpack.c.l.b16 %v137
    %v563 = vunpack.c.h.b16 %v137
    %v564 = vunpack.c.l.b16 %v138
    %v565 = vunpack.c.h.b16 %v138
    %v566 = vunpack.c.l.b16 %v139
    %v567 = vunpack.c.h.b16 %v139
    %v568 = vunpack.c.l.b16 %v140
    %v569 = vunpack.c.h.b16 %v140
    %v570 = vunpack.c.l.b16 %v141
    %v571 = vunpack.c.h.b16 %v141
    %v572 = vunpack.c.l.b16 %v142
    %v573 = vunpack.c.h.b16 %v142
    %v574 = vunpack.c.l.b16 %v143
    %v575 = vunpack.c.h.b16 %v143
    %v576 = vunpack.c.l.b16 %v144
    %v577 = vunpack.c.h.b16 %v144
    %v578 = vunpack.c.l.b16 %v145
    %v579 = vunpack.c.h.b16 %v145
    %v580 = vunpack.c.l.b16 %v146
    %v581 = vunpack.c.h.b16 %v146
    %v582 = vunpack.c.l.b16 %v147
    %v583 = vunpack.c.h.b16 %v147
    %v584 = vunpack.c.l.b16 %v148
    %v585 = vunpack.c.h.b16 %v148
    %v586 = vunpack.c.l.b16 %v149
    %v587 = vunpack.c.h.b16 %v149
    %v588 = vunpack.c.l.b16 %v150
    %v589 = vunpack.c.h.b16 %v150
    %v590 = vunpack.c.l.b16 %v151
    %v591 = vunpack.c.h.b16 %v151
    %v592 = vunpack.c.l.b16 %v152
    %v593 = vunpack.c.h.b16 %v152
    %v594 = vunpack.c.l.b16 %v153
    %v595 = vunpack.c.h.b16 %v153
    %v596 = vpack.c.b16 %v342, %v340
    %v597 = vpack.c.b16 %v343, %v341
    %v598 = vpack.c.b16 %v346, %v344
    %v599 = vpack.c.b16 %v347, %v345
    %v600 = vpack.c.b16 %v350, %v348
    %v601 = vpack.c.b16 %v351, %v349
    %v602 = vpack.c.b16 %v354, %v352
    %v603 = vpack.c.b16 %v355, %v353
    %v604 = vpack.c.b16 %v358, %v356
    %v605 = vpack.c.b16 %v359, %v357
    %v606 = vpack.c.b16 %v362, %v360
    %v607 = vpack.c.b16 %v363, %v361
    %v608 = vpack.c.b16 %v366, %v364
    %v609 = vpack.c.b16 %v367, %v365
    %v610 = vpack.c.b16 %v370, %v368
    %v611 = vpack.c.b16 %v371, %v369
    %v612 = vpack.c.b16 %v374, %v372
    %v613 = vpack.c.b16 %v375, %v373
    %v614 = vpack.c.b16 %v378, %v376
    %v615 = vpack.c.b16 %v379, %v377
    %v616 = vpack.c.b16 %v382, %v380
    %v617 = vpack.c.b16 %v383, %v381
    %v618 = vpack.c.b16 %v386, %v384
    %v619 = vpack.c.b16 %v387, %v385
    %v620 = vpack.c.b16 %v390, %v388
    %v621 = vpack.c.b16 %v391, %v389
    %v622 = vpack.c.b16 %v394, %v392
    %v623 = vpack.c.b16 %v395, %v393
    %v624 = vpack.c.b16 %v398, %v396
    %v625 = vpack.c.b16 %v399, %v397
    %v626 = vpack.c.b16 %v402, %v400
    %v627 = vpack.c.b16 %v403, %v401
    %v628 = vpack.c.b16 %v406, %v404
    %v629 = vpack.c.b16 %v407, %v405
    %v630 = vpack.c.b16 %v410, %v408
    %v631 = vpack.c.b16 %v411, %v409
    %v632 = vpack.c.b16 %v414, %v412
    %v633 = vpack.c.b16 %v415, %v413
    %v634 = vpack.c.b16 %v418, %v416
    %v635 = vpack.c.b16 %v419, %v417
    %v636 = vpack.c.b16 %v422, %v420
    %v637 = vpack.c.b16 %v423, %v421
    %v638 = vpack.c.b16 %v426, %v424
    %v639 = vpack.c.b16 %v427, %v425
    %v640 = vpack.c.b16 %v430, %v428
    %v641 = vpack.c.b16 %v431, %v429
    %v642 = vpack.c.b16 %v434, %v432
    %v643 = vpack.c.b16 %v435, %v433
    %v644 = vpack.c.b16 %v438, %v436
    %v645 = vpack.c.b16 %v439, %v437
    %v646 = vpack.c.b16 %v442, %v440
    %v647 = vpack.c.b16 %v443, %v441
    %v648 = vpack.c.b16 %v446, %v444
    %v649 = vpack.c.b16 %v447, %v445
    %v650 = vpack.c.b16 %v450, %v448
    %v651 = vpack.c.b16 %v451, %v449
    %v652 = vpack.c.b16 %v454, %v452
    %v653 = vpack.c.b16 %v455, %v453
    %v654 = vpack.c.b16 %v458, %v456
    %v655 = vpack.c.b16 %v459, %v457
    %v656 = vpack.c.b16 %v462, %v460
    %v657 = vpack.c.b16 %v463, %v461
    %v658 = vpack.c.b16 %v466, %v464
    %v659 = vpack.c.b16 %v467, %v465
    %v660 = vpack.c.b16 %v470, %v468
    %v661 = vpack.c.b16 %v471, %v469
    %v662 = vpack.c.b16 %v474, %v472
    %v663 = vpack.c.b16 %v475, %v473
    %v664 = vpack.c.b16 %v478, %v476
    %v665 = vpack.c.b16 %v479, %v477
    %v666 = vpack.c.b16 %v482, %v480
    %v667 = vpack.c.b16 %v483, %v481
    %v668 = vpack.c.b16 %v486, %v484
    %v669 = vpack.c.b16 %v487, %v485
    %v670 = vpack.c.b16 %v490, %v488
    %v671 = vpack.c.b16 %v491, %v489
    %v672 = vpack.c.b16 %v494, %v492
    %v673 = vpack.c.b16 %v495, %v493
    %v674 = vpack.c.b16 %v498, %v496
    %v675 = vpack.c.b16 %v499, %v497
    %v676 = vpack.c.b16 %v502, %v500
    %v677 = vpack.c.b16 %v503, %v501
    %v678 = vpack.c.b16 %v506, %v504
    %v679 = vpack.c.b16 %v507, %v505
    %v680 = vpack.c.b16 %v510, %v508
    %v681 = vpack.c.b16 %v511, %v509
    %v682 = vpack.c.b16 %v514, %v512
    %v683 = vpack.c.b16 %v515, %v513
    %v684 = vpack.c.b16 %v518, %v516
    %v685 = vpack.c.b16 %v519, %v517
    %v686 = vpack.c.b16 %v522, %v520
    %v687 = vpack.c.b16 %v523, %v521
    %v688 = vpack.c.b16 %v526, %v524
    %v689 = vpack.c.b16 %v527, %v525
    %v690 = vpack.c.b16 %v530, %v528
    %v691 = vpack.c.b16 %v531, %v529
    %v692 = vpack.c.b16 %v534, %v532
    %v693 = vpack.c.b16 %v535, %v533
    %v694 = vpack.c.b16 %v538, %v536
    %v695 = vpack.c.b16 %v539, %v537
    %v696 = vpack.c.b16 %v542, %v540
    %v697 = vpack.c.b16 %v543, %v541
    %v698 = vpack.c.b16 %v546, %v544
    %v699 = vpack.c.b16 %v547, %v545
    %v700 = vpack.c.b16 %v550, %v548
    %v701 = vpack.c.b16 %v551, %v549
    %v702 = vpack.c.b16 %v554, %v552
    %v703 = vpack.c.b16 %v555, %v553
    %v704 = vpack.c.b16 %v558, %v556
    %v705 = vpack.c.b16 %v559, %v557
    %v706 = vpack.c.b16 %v562, %v560
    %v707 = vpack.c.b16 %v563, %v561
    %v708 = vpack.c.b16 %v566, %v564
    %v709 = vpack.c.b16 %v567, %v565
    %v710 = vpack.c.b16 %v570, %v568
    %v711 = vpack.c.b16 %v571, %v569
    %v712 = vpack.c.b16 %v574, %v572
    %v713 = vpack.c.b16 %v575, %v573
    %v714 = vpack.c.b16 %v578, %v576
    %v715 = vpack.c.b16 %v579, %v577
    %v716 = vpack.c.b16 %v582, %v580
    %v717 = vpack.c.b16 %v583, %v581
    %v718 = vpack.c.b16 %v586, %v584
    %v719 = vpack.c.b16 %v587, %v585
    %v720 = vpack.c.b16 %v590, %v588
    %v721 = vpack.c.b16 %v591, %v589
    %v722 = vpack.c.b16 %v594, %v592
    %v723 = vpack.c.b16 %v595, %v593
    %852 = vmatprep.subr.bf16.mxu0 %v611
    %853 = vmatpush1.bf16.msra.mxu0 %v610
    %854 = vmatprep.subr.bf16.mxu0 %v609
    %855 = vmatpush1.bf16.msra.mxu0 %v608
    %856 = vmatprep.subr.bf16.mxu0 %v607
    %857 = vmatpush1.bf16.msra.mxu0 %v606
    %858 = vmatprep.subr.bf16.mxu0 %v605
    %859 = vmatpush1.bf16.msra.mxu0 %v604
    %860 = vmatprep.subr.bf16.mxu0 %v603
    %861 = vmatpush1.bf16.msra.mxu0 %v602
    %862 = vmatprep.subr.bf16.mxu0 %v601
    %863 = vmatpush1.bf16.msra.mxu0 %v600
    %864 = vmatprep.subr.bf16.mxu0 %v599
    %865 = vmatpush1.bf16.msra.mxu0 %v598
    %866 = vmatprep.subr.bf16.mxu0 %v597
    %867 = vmatpush1.bf16.msra.mxu0 %v596
    %868 = vmatprep.subr.bf16.mxu0 %v627
    %869 = vmatpush2.bf16.msra.mxu0 %v626
    %870 = vmatprep.subr.bf16.mxu0 %v625
    %871 = vmatpush2.bf16.msra.mxu0 %v624
    %872 = vmatprep.subr.bf16.mxu0 %v623
    %873 = vmatpush2.bf16.msra.mxu0 %v622
    %874 = vmatprep.subr.bf16.mxu0 %v621
    %875 = vmatpush2.bf16.msra.mxu0 %v620
    %876 = vmatprep.subr.bf16.mxu0 %v619
    %877 = vmatpush2.bf16.msra.mxu0 %v618
    %878 = vmatprep.subr.bf16.mxu0 %v617
    %879 = vmatpush2.bf16.msra.mxu0 %v616
    %880 = vmatprep.subr.bf16.mxu0 %v615
    %881 = vmatpush2.bf16.msra.mxu0 %v614
    %882 = vmatprep.subr.bf16.mxu0 %v613
    %883 = vmatpush2.bf16.msra.mxu0 %v612
    %884 = vmatprep.mubr.bf16.mxu0 %v192
    %885 = vmatmul.mubr.bf16.gmra.mxu0 %v178
    %v886 = vpop.f32.mrf.mxu0
    %v887 = vadd.f32 0.0, %v886
    %v888 = vpop.f32.mrf.mxu0
    %v889 = vadd.f32 0.0, %v888
    %v890 = vpop.f32.mrf.mxu0
    %v891 = vpop.f32.mrf.mxu0
    %892 = vdwg.mxu0
    %893 = vmatprep.subr.bf16.mxu0 %v643
    %894 = vmatpush1.bf16.msra.mxu0 %v642
    %895 = vmatprep.subr.bf16.mxu0 %v641
    %896 = vmatpush1.bf16.msra.mxu0 %v640
    %897 = vmatprep.subr.bf16.mxu0 %v639
    %898 = vmatpush1.bf16.msra.mxu0 %v638
    %899 = vmatprep.subr.bf16.mxu0 %v637
    %900 = vmatpush1.bf16.msra.mxu0 %v636
    %901 = vmatprep.subr.bf16.mxu0 %v635
    %902 = vmatpush1.bf16.msra.mxu0 %v634
    %903 = vmatprep.subr.bf16.mxu0 %v633
    %904 = vmatpush1.bf16.msra.mxu0 %v632
    %905 = vmatprep.subr.bf16.mxu0 %v631
    %906 = vmatpush1.bf16.msra.mxu0 %v630
    %907 = vmatprep.subr.bf16.mxu0 %v629
    %908 = vmatpush1.bf16.msra.mxu0 %v628
    %909 = vmatprep.subr.bf16.mxu0 %v659
    %910 = vmatpush2.bf16.msra.mxu0 %v658
    %911 = vmatprep.subr.bf16.mxu0 %v657
    %912 = vmatpush2.bf16.msra.mxu0 %v656
    %913 = vmatprep.subr.bf16.mxu0 %v655
    %914 = vmatpush2.bf16.msra.mxu0 %v654
    %915 = vmatprep.subr.bf16.mxu0 %v653
    %916 = vmatpush2.bf16.msra.mxu0 %v652
    %917 = vmatprep.subr.bf16.mxu0 %v651
    %918 = vmatpush2.bf16.msra.mxu0 %v650
    %919 = vmatprep.subr.bf16.mxu0 %v649
    %920 = vmatpush2.bf16.msra.mxu0 %v648
    %921 = vmatprep.subr.bf16.mxu0 %v647
    %922 = vmatpush2.bf16.msra.mxu0 %v646
    %923 = vmatprep.subr.bf16.mxu0 %v645
    %924 = vmatpush2.bf16.msra.mxu0 %v644
    %925 = vmatprep.mubr.bf16.mxu0 %v202
    %926 = vmatmul.mubr.bf16.gmra.mxu0 %v200
    %v927 = vpop.f32.mrf.mxu0
    %v928 = vadd.f32 %v887, %v927
    %v929 = vpop.f32.mrf.mxu0
    %v930 = vadd.f32 %v889, %v929
    %v931 = vpop.f32.mrf.mxu0
    %v932 = vpop.f32.mrf.mxu0
    %933 = vdwg.mxu0
    %934 = vmatprep.subr.bf16.mxu0 %v675
    %935 = vmatpush1.bf16.msra.mxu0 %v674
    %936 = vmatprep.subr.bf16.mxu0 %v673
    %937 = vmatpush1.bf16.msra.mxu0 %v672
    %938 = vmatprep.subr.bf16.mxu0 %v671
    %939 = vmatpush1.bf16.msra.mxu0 %v670
    %940 = vmatprep.subr.bf16.mxu0 %v669
    %941 = vmatpush1.bf16.msra.mxu0 %v668
    %942 = vmatprep.subr.bf16.mxu0 %v667
    %943 = vmatpush1.bf16.msra.mxu0 %v666
    %944 = vmatprep.subr.bf16.mxu0 %v665
    %945 = vmatpush1.bf16.msra.mxu0 %v664
    %946 = vmatprep.subr.bf16.mxu0 %v663
    %947 = vmatpush1.bf16.msra.mxu0 %v662
    %948 = vmatprep.subr.bf16.mxu0 %v661
    %949 = vmatpush1.bf16.msra.mxu0 %v660
    %950 = vmatprep.subr.bf16.mxu0 %v691
    %951 = vmatpush2.bf16.msra.mxu0 %v690
    %952 = vmatprep.subr.bf16.mxu0 %v689
    %953 = vmatpush2.bf16.msra.mxu0 %v688
    %954 = vmatprep.subr.bf16.mxu0 %v687
    %955 = vmatpush2.bf16.msra.mxu0 %v686
    %956 = vmatprep.subr.bf16.mxu0 %v685
    %957 = vmatpush2.bf16.msra.mxu0 %v684
    %958 = vmatprep.subr.bf16.mxu0 %v683
    %959 = vmatpush2.bf16.msra.mxu0 %v682
    %960 = vmatprep.subr.bf16.mxu0 %v681
    %961 = vmatpush2.bf16.msra.mxu0 %v680
    %962 = vmatprep.subr.bf16.mxu0 %v679
    %963 = vmatpush2.bf16.msra.mxu0 %v678
    %964 = vmatprep.subr.bf16.mxu0 %v677
    %965 = vmatpush2.bf16.msra.mxu0 %v676
    %966 = vmatprep.mubr.bf16.mxu0 %v199
    %967 = vmatmul.mubr.bf16.gmra.mxu0 %v185
    %v968 = vpop.f32.mrf.mxu0
    %v969 = vadd.f32 %v928, %v968
    %v970 = vpop.f32.mrf.mxu0
    %v971 = vadd.f32 %v930, %v970
    %v972 = vpop.f32.mrf.mxu0
    %v973 = vpop.f32.mrf.mxu0
    %974 = vdwg.mxu0
    %975 = vmatprep.subr.bf16.mxu0 %v707
    %976 = vmatpush1.bf16.msra.mxu0 %v706
    %977 = vmatprep.subr.bf16.mxu0 %v705
    %978 = vmatpush1.bf16.msra.mxu0 %v704
    %979 = vmatprep.subr.bf16.mxu0 %v703
    %980 = vmatpush1.bf16.msra.mxu0 %v702
    %981 = vmatprep.subr.bf16.mxu0 %v701
    %982 = vmatpush1.bf16.msra.mxu0 %v700
    %983 = vmatprep.subr.bf16.mxu0 %v699
    %984 = vmatpush1.bf16.msra.mxu0 %v698
    %985 = vmatprep.subr.bf16.mxu0 %v697
    %986 = vmatpush1.bf16.msra.mxu0 %v696
    %987 = vmatprep.subr.bf16.mxu0 %v695
    %988 = vmatpush1.bf16.msra.mxu0 %v694
    %989 = vmatprep.subr.bf16.mxu0 %v693
    %990 = vmatpush1.bf16.msra.mxu0 %v692
    %991 = vmatprep.subr.bf16.mxu0 %v723
    %992 = vmatpush2.bf16.msra.mxu0 %v722
    %993 = vmatprep.subr.bf16.mxu0 %v721
    %994 = vmatpush2.bf16.msra.mxu0 %v720
    %995 = vmatprep.subr.bf16.mxu0 %v719
    %996 = vmatpush2.bf16.msra.mxu0 %v718
    %997 = vmatprep.subr.bf16.mxu0 %v717
    %998 = vmatpush2.bf16.msra.mxu0 %v716
    %999 = vmatprep.subr.bf16.mxu0 %v715
    %1000 = vmatpush2.bf16.msra.mxu0 %v714
    %1001 = vmatprep.subr.bf16.mxu0 %v713
    %1002 = vmatpush2.bf16.msra.mxu0 %v712
    %1003 = vmatprep.subr.bf16.mxu0 %v711
    %1004 = vmatpush2.bf16.msra.mxu0 %v710
    %1005 = vmatprep.subr.bf16.mxu0 %v709
    %1006 = vmatpush2.bf16.msra.mxu0 %v708
    %1007 = vmatprep.mubr.bf16.mxu0 %v203
    %1008 = vmatmul.mubr.bf16.gmra.mxu0 %v201
    %v1009 = vpop.f32.mrf.mxu0
    %v1010 = vadd.f32 %v969, %v1009
    %v1011 = vpop.f32.mrf.mxu0
    %v1012 = vadd.f32 %v971, %v1011
    %v1013 = vpop.f32.mrf.mxu0
    %v1014 = vpop.f32.mrf.mxu0
    %1015 = vdwg.mxu0
    %v1018 = vcombine.low %v1010, %v1012
    %v1020 = vunpack.c.l.s4 1983009808
    %v1021 = vunpack.c.0.s8 %v1020
    %v1022 = vlaneseq
    %v1023 = vshrl.u32 %v1022, 7
    %v1024 = vsub.s32 %v1021, %v1023
    %v1025 = vrot.slane %v1018, %v1024
    %1027 = vst [vmem:[%s2] sm:$0xf] %v1025
    // Predicated region
    $region14: #{lazy_linear_modulator.1} parent=1 // pred_check
      _
    $region15: #{lazy_linear_modulator.1} parent=1 // pred_check_branch
      %1029 = sbr.rel (0) target = $region17
    $region16: #{lazy_linear_modulator.1} parent=1 // pred_region
      _
    $region17: #{lazy_linear_modulator.1} parent=1 // pred_fallthru
      _
    // Predicated region
    $region18: #{lazy_linear_modulator.1} parent=1 // pred_check
      _
    $region19: #{lazy_linear_modulator.1} parent=1 // pred_check_branch
      %1031 = sbr.rel (0) target = $region21
    $region20: #{lazy_linear_modulator.1} parent=1 // pred_region
      _
    $region21: #{lazy_linear_modulator.1} parent=1 // pred_fallthru
      _
    %1032 = vsyncpa [#allocation3], 1

</llo_original>
